<compile_context>
chip_gen: v6e
topology: v6e:2x2x1
jax: 0.10.0
libtpu: 0.0.40
codegen_flags: <defaults>
</compile_context>

<pallas_src>
import functools

import jax
import jax.numpy as jnp
import numpy as np
from jax.experimental import pallas as pl
from jax.experimental.pallas import tpu as pltpu

# ---- problem sizes (small, consistent with the module's census path) ----
N = 8            # batch
F = 32           # num_features
R = 16           # runits[0]
E = 4            # num_experts
T = 3            # num_tasks
LANES = 128      # lane-dense half-width: experts at [0,128), gates at [128,256)


def mmoe_kernel(x_ref, w_ref, p_ref, out_ref, *, lanes):
    # ONE lane-aligned 256-wide MXU push: experts (pre-tiled per task, with bout
    # and the row-indexed expert_bias folded in via the two extra input columns)
    # at lanes [0, 128); all gate logits (gate_bias folded in) at [128, 256).
    fused = jnp.dot(x_ref[...], w_ref[...],
                    preferred_element_type=jnp.float32)             # (bn, 256)

    eo = jnp.maximum(fused[:, :lanes], 0.0)                         # relu(experts), (bn, 128)
    logits = fused[:, lanes:]                                       # gates, (bn, 128); pad lanes = -1e30

    # Batched softmax over all tasks at once.  Softmax is shift-invariant per
    # group, so one per-row global max (single XLU reduce) suffices; pad gate
    # lanes carry a -1e30 bias so they never win the max and exp() to exactly 0.
    # TODO(synk): a per-task max would only be needed if one task's logits could
    # sit >~88 below the row's global max (f32 exp underflow) — not the case here.
    p = jnp.exp(logits - jnp.max(logits, axis=-1, keepdims=True))   # (bn, 128)

    # Per-task denominators, broadcast within each group, via one tiny MXU push
    # against the block-diagonal ones matrix (rows [0, 128) of the param slab).
    denom = jnp.dot(p, p_ref[:lanes, :],
                    preferred_element_type=jnp.float32)             # (bn, 128)
    gate = p / denom                                                # exact divide (parity)

    # Mix + per-task bias (row `lanes` of the param slab); single unmasked
    # lane-dense 128-wide store.
    tb = p_ref[lanes:lanes + 1, :]                                  # (1, 128)
    out_ref[...] = (gate * eo + tb).astype(out_ref.dtype)


def mmoe_forward(x, expert_kernels, wout, bout, expert_bias,
                 gate_kernels, gate_bias, task_bias):
    n, f = x.shape
    num_experts = expert_kernels.shape[0]
    num_tasks = gate_kernels.shape[0]
    te = num_tasks * num_experts
    assert te <= LANES

    # ---------- host-side (plain-JAX) parameter prep; hot path stays in-kernel ----------
    # Expert path is linear end-to-end: x @ ek[e] @ wout[e] + bout[e]
    #                                 == x @ (ek[e] @ wout[e]) + bout[e]
    w_exp = jnp.einsum('efr,ero->fe', expert_kernels, wout)            # (F, E)
    w_exp_tiled = jnp.tile(w_exp, (1, num_tasks))                      # (F, T*E), pre-tiled per task
    w_gate = jnp.transpose(gate_kernels, (1, 0, 2)).reshape(f, te)     # (F, T*E)

    # Fused weight, 256 lanes wide so both halves sit on vreg boundaries.
    # Two extra feature rows fold every bias into the single matmul:
    #   row f   : multiplied by a constant-1 column of x -> bout (experts) /
    #             gate_bias (gates); gate pad lanes get -1e30 so exp() -> 0.
    #   row f+1 : multiplied by the per-row expert_bias column of x -> the quirky
    #             row-indexed bias from the torch code (expert_outputs[i] += expert_bias[i]).
    f2 = f + 2
    kp = -(-f2 // 8) * 8            # pad contraction dim to a sublane multiple
    w_fused = jnp.zeros((kp, 2 * LANES), jnp.float32)
    w_fused = w_fused.at[:f, :te].set(w_exp_tiled)
    w_fused = w_fused.at[:f, LANES:LANES + te].set(w_gate)
    w_fused = w_fused.at[f, :te].set(jnp.tile(bout, (num_tasks,)))
    w_fused = w_fused.at[f, LANES:LANES + te].set(gate_bias.reshape(te))
    w_fused = w_fused.at[f, LANES + te:].set(-1e30)
    w_fused = w_fused.at[f + 1, :LANES].set(1.0)

    # Augmented input: [x | 1 | row-indexed expert_bias | 0-pad].
    m = min(n, num_experts)
    rb_col = jnp.zeros((n,), jnp.float32).at[:m].set(expert_bias[:m])
    x_aug = jnp.concatenate(
        [x.astype(jnp.float32),
         jnp.ones((n, 1), jnp.float32),
         rb_col[:, None],
         jnp.zeros((n, kp - f2), jnp.float32)], axis=1)                # (N, kp)

    # Single lane-padded parameter slab (one DMA):
    #   rows [0, 128) : block-diagonal ones matrix -> per-task softmax denominator
    #                   already broadcast within each group; pad lanes share group 0
    #                   (their exp() is exactly 0, so real groups stay exact and pad
    #                   columns keep a positive denominator -> no NaN anywhere).
    #   row 128       : per-task output bias, flattened task-major.
    #   rows 129..135 : zero padding to keep the slab sublane-aligned.
    lane = jnp.arange(LANES)
    grp = jnp.where(lane < te, lane // num_experts, 0)
    gsum = (grp[:, None] == grp[None, :]).astype(jnp.float32)          # (128, 128)
    tb_row = jnp.zeros((LANES,), jnp.float32).at[:te].set(
        jnp.repeat(task_bias, num_experts))
    p_slab = jnp.zeros((LANES + 8, LANES), jnp.float32)
    p_slab = p_slab.at[:LANES, :].set(gsum)
    p_slab = p_slab.at[LANES, :].set(tb_row)

    # N-grid: a single block at these sizes, but "parallel" lets the two
    # TensorCores of a v7x chip split larger batches; free on v5e/v6e.
    n_pad = -(-n // 8) * 8
    block_n = min(n_pad, 512)
    n_pad = -(-n_pad // block_n) * block_n
    if n_pad != n:
        x_aug = jnp.concatenate(
            [x_aug, jnp.zeros((n_pad - n, kp), jnp.float32)], axis=0)
    grid = (n_pad // block_n,)

    kernel = functools.partial(mmoe_kernel, lanes=LANES)
    out_full = pl.pallas_call(
        kernel,
        out_shape=jax.ShapeDtypeStruct((n_pad, LANES), jnp.float32),
        grid_spec=pltpu.PrefetchScalarGridSpec(
            num_scalar_prefetch=0,
            grid=grid,
            in_specs=[
                pl.BlockSpec((block_n, kp), lambda i: (i, 0)),         # x_aug
                pl.BlockSpec((kp, 2 * LANES), lambda i: (0, 0)),       # fused weight
                pl.BlockSpec((LANES + 8, LANES), lambda i: (0, 0)),    # param slab
            ],
            out_specs=pl.BlockSpec((block_n, LANES), lambda i: (i, 0)),
        ),
        compiler_params=pltpu.CompilerParams(
            dimension_semantics=("parallel",)),
    )(x_aug, w_fused, p_slab)

    # Free layout plumbing outside the kernel: lane-dense (n_pad, 128) -> (T, N, E).
    return (out_full[:n, :te]
            .reshape(n, num_tasks, num_experts)
            .transpose(1, 0, 2))


def mmoe_reference(x, expert_kernels, wout, bout, expert_bias,
                   gate_kernels, gate_bias, task_bias):
    n = x.shape[0]
    cols = [x @ expert_kernels[e] @ wout[e] + bout[e] for e in range(E)]
    eo = jnp.concatenate(cols, axis=1)                                          # (N, E)
    row_bias = jnp.concatenate([expert_bias, jnp.zeros((n - E,), jnp.float32)])[:, None]
    eo = jax.nn.relu(eo + row_bias)
    outs = []
    for t in range(T):
        gate = jax.nn.softmax(x @ gate_kernels[t] + gate_bias[t], axis=-1)
        outs.append(gate * eo + task_bias[t])
    return jnp.stack(outs, axis=0)


if __name__ == "__main__":
    key = jax.random.PRNGKey(0)
    kx, kek, kwo, kbo, kgk = jax.random.split(key, 5)

    # deterministic parameter init (shapes per MMoE.__init__, census / expert=None)
    x = jax.random.normal(kx, (N, F), jnp.float32)
    expert_kernels = jax.random.uniform(kek, (E, F, R), jnp.float32)            # torch.rand-like
    bound = 1.0 / np.sqrt(R)
    wout = jax.random.uniform(kwo, (E, R, 1), jnp.float32, -bound, bound)       # Linear(R,1) weights
    bout = jax.random.uniform(kbo, (E,), jnp.float32, -bound, bound)            # Linear(R,1) biases
    expert_bias = jnp.zeros((E,), jnp.float32)                                  # torch.zeros
    gate_kernels = jax.random.uniform(kgk, (T, F, E), jnp.float32)              # torch.rand-like
    gate_bias = jnp.zeros((T, 1, E), jnp.float32)                               # torch.zeros
    task_bias = jnp.zeros((T,), jnp.float32)                                    # torch.zeros

    out = mmoe_forward(x, expert_kernels, wout, bout, expert_bias,
                       gate_kernels, gate_bias, task_bias)
    out = jax.block_until_ready(out)

    ref = mmoe_reference(x, expert_kernels, wout, bout, expert_bias,
                         gate_kernels, gate_bias, task_bias)
    np.testing.assert_allclose(np.asarray(out), np.asarray(ref), rtol=1e-2, atol=1e-2)
    assert out.shape == (T, N, E)

    print("KERNEL_OK")
</pallas_src>

<mosaic_0001>
module attributes {stable_mosaic.version = 11 : i64} {
  func.func @mmoe_kernel(%arg0: i32, %arg1: memref<8x40xf32, #tpu.memory_space<vmem>>, %arg2: memref<40x256xf32, #tpu.memory_space<vmem>>, %arg3: memref<136x128xf32, #tpu.memory_space<vmem>>, %arg4: memref<8x128xf32, #tpu.memory_space<vmem>>) attributes {dimension_semantics = [#tpu.dimension_semantics<parallel>], iteration_bounds = array<i64: 1>, scalar_prefetch = 0 : i64, scratch_operands = 0 : i64, tpu.core_type = #tpu.core_type<tc>, window_params = [{transform_indices = @transform_0, window_bounds = array<i64: 8, 40>}, {pipeline_mode = #tpu.pipeline_mode<synchronous>, transform_indices = @transform_1, window_bounds = array<i64: 40, 256>}, {pipeline_mode = #tpu.pipeline_mode<synchronous>, transform_indices = @transform_2, window_bounds = array<i64: 136, 128>}, {transform_indices = @transform_3, window_bounds = array<i64: 8, 128>}]} {
    %c0 = arith.constant 0 : index
    %c0_0 = arith.constant 0 : index
    %0 = vector.load %arg1[%c0, %c0_0] : memref<8x40xf32, #tpu.memory_space<vmem>>, vector<8x40xf32>
    %c0_1 = arith.constant 0 : index
    %c0_2 = arith.constant 0 : index
    %1 = vector.load %arg2[%c0_1, %c0_2] : memref<40x256xf32, #tpu.memory_space<vmem>>, vector<40x256xf32>
    %cst = arith.constant dense<0.000000e+00> : vector<8x256xf32>
    %2 = tpu.matmul %0, %1, %cst {dimension_numbers = #tpu.dot_dimension_numbers<[1], [0], [0], [1], [0, 0, 1, 1], [], []>} : vector<8x40xf32>, vector<40x256xf32>, vector<8x256xf32> -> vector<8x256xf32>
    %3 = vector.extract_strided_slice %2 {offsets = [0, 0], sizes = [8, 128], strides = [1, 1]} : vector<8x256xf32> to vector<8x128xf32>
    %cst_3 = arith.constant 0.000000e+00 : f32
    %4 = vector.broadcast %cst_3 : f32 to vector<8x128xf32>
    %5 = arith.maximumf %3, %4 : vector<8x128xf32>
    %6 = vector.extract_strided_slice %2 {offsets = [0, 128], sizes = [8, 128], strides = [1, 1]} : vector<8x256xf32> to vector<8x128xf32>
    %cst_4 = arith.constant dense<0xFF800000> : vector<8xf32>
    %7 = vector.multi_reduction <maximumf>, %6, %cst_4 [1] : vector<8x128xf32> to vector<8xf32>
    %8 = vector.shape_cast %7 : vector<8xf32> to vector<8x1xf32>
    %9 = vector.broadcast %8 : vector<8x1xf32> to vector<8x128xf32>
    %10 = arith.subf %6, %9 : vector<8x128xf32>
    %11 = math.exp %10 : vector<8x128xf32>
    %c0_5 = arith.constant 0 : index
    %c0_6 = arith.constant 0 : index
    %12 = vector.load %arg3[%c0_5, %c0_6] : memref<136x128xf32, #tpu.memory_space<vmem>>, vector<128x128xf32>
    %cst_7 = arith.constant dense<0.000000e+00> : vector<8x128xf32>
    %13 = tpu.matmul %11, %12, %cst_7 {dimension_numbers = #tpu.dot_dimension_numbers<[1], [0], [0], [1], [0, 0, 1, 1], [], []>} : vector<8x128xf32>, vector<128x128xf32>, vector<8x128xf32> -> vector<8x128xf32>
    %14 = arith.divf %11, %13 : vector<8x128xf32>
    %c128 = arith.constant 128 : index
    %c0_8 = arith.constant 0 : index
    %15 = vector.load %arg3[%c128, %c0_8] : memref<136x128xf32, #tpu.memory_space<vmem>>, vector<1x128xf32>
    %16 = arith.mulf %14, %5 : vector<8x128xf32>
    %17 = vector.broadcast %15 : vector<1x128xf32> to vector<8x128xf32>
    %18 = arith.addf %16, %17 : vector<8x128xf32>
    %c0_9 = arith.constant 0 : index
    %c0_10 = arith.constant 0 : index
    %19 = vector.load %arg4[%c0_9, %c0_10] : memref<8x128xf32, #tpu.memory_space<vmem>>, vector<8x128xf32>
    tpu.vector_store %arg4[%c0_9, %c0_10], %18 {strides = array<i32>} : memref<8x128xf32, #tpu.memory_space<vmem>>, vector<8x128xf32>,
    return
  }
  func.func @transform_0(%arg0: i32) -> (i32, i32) {
    %c0_i32 = arith.constant 0 : i32
    %c0_i32_0 = arith.constant 0 : i32
    return %arg0, %c0_i32 : i32, i32
  }
  func.func @transform_1(%arg0: i32) -> (i32, i32) {
    %c0_i32 = arith.constant 0 : i32
    %c0_i32_0 = arith.constant 0 : i32
    %c0_i32_1 = arith.constant 0 : i32
    return %c0_i32, %c0_i32_0 : i32, i32
  }
  func.func @transform_2(%arg0: i32) -> (i32, i32) {
    %c0_i32 = arith.constant 0 : i32
    %c0_i32_0 = arith.constant 0 : i32
    %c0_i32_1 = arith.constant 0 : i32
    return %c0_i32, %c0_i32_0 : i32, i32
  }
  func.func @transform_3(%arg0: i32) -> (i32, i32) {
    %c0_i32 = arith.constant 0 : i32
    %c0_i32_0 = arith.constant 0 : i32
    return %arg0, %c0_i32 : i32, i32
  }
}

</mosaic_0001>

<llo_original>
// kernel: tpu_custom_call.1
$region0: #{tpu_custom_call.1}
  #allocation0 [shape = 'u32[]', space=smem, size = 0x4, offset = 0x4, fixed_abs, tag = 'smem constant byte address 0x4 - core index']
  #allocation1 [shape = 'u32[144,128]{1,0:T(1,128)}', space=vmem, size = 0x12000, scoped, tag = 'internal scratch']
  %s0 = inlined_call_operand.hbm [shape: f32[8,40], index: 0, kind: input, shape index: {}]
  %s1 = inlined_call_operand.hbm [shape: f32[40,256], index: 1, kind: input, shape index: {}]
  %s2 = inlined_call_operand.hbm [shape: f32[136,128], index: 2, kind: input, shape index: {}]
  %s3 = inlined_call_operand.hbm [shape: f32[8,128], index: 3, kind: output, shape index: {}]
  %s4 = sld [smem:[#allocation0]]
  $region34: #{tpu_custom_call.1} parent=0
    _
  %s6 = ssub.s32 1, %s4
  %s7 = scalar_select 0, %s6, %s4
  $region1: #{tpu_custom_call.1} parent=0
    #allocation2 [shape = 'u8[4096]{0}', space=vmem, size = 0x1000, scoped, tag = 'input window, operand 0, single buffered']
    #allocation3 [shape = 's32[1]{0}', space=sflag, size = 0x4, scoped, tag = 'scoped memory for tpu_custom_call.1']
    #allocation4 [shape = 's32[1]{0}', space=sflag, size = 0x4, scoped, tag = 'scoped memory for tpu_custom_call.1']
    #allocation5 [shape = 'u8[40960]{0}', space=vmem, size = 0xa000, scoped, tag = 'input window, operand 1, single buffered']
    #allocation6 [shape = 's32[1]{0}', space=sflag, size = 0x4, scoped, tag = 'scoped memory for tpu_custom_call.1']
    #allocation7 [shape = 'u8[69632]{0}', space=vmem, size = 0x11000, scoped, tag = 'input window, operand 2, single buffered']
    #allocation8 [shape = 'u8[4096]{0}', space=vmem, size = 0x1000, scoped, tag = 'output window, operand 0, single buffered']
    %8 = vsyncpa [#allocation3], 0
    %9 = vsyncpa [#allocation6], 0
    %10 = vsyncpa [#allocation4], 0
    // Predicated region
    $region2: #{tpu_custom_call.1} parent=1 // pred_check
      _
    $region3: #{tpu_custom_call.1} parent=1 // pred_check_branch
      %12 = sbr.rel (0) target = $region5
    $region4: #{tpu_custom_call.1} parent=1 // pred_region
      %s14 = ssub.s32 128, 128
      %15 = vsyncadd [#allocation3], %s14
      %s17 = sshll.u32 [#allocation2], 4
      %s18 = int_to_ptr.vmem [resolvable:$true] %s17
      %20 = dma.hbm_to_vmem [thread:$0]  %s0, 128, %s18, [#allocation3]
    $region5: #{tpu_custom_call.1} parent=1 // pred_fallthru
      _
    // Predicated region
    $region6: #{tpu_custom_call.1} parent=1 // pred_check
      _
    $region7: #{tpu_custom_call.1} parent=1 // pred_check_branch
      %22 = sbr.rel (0) target = $region9
    $region8: #{tpu_custom_call.1} parent=1 // pred_region
      %s24 = ssub.s32 1280, 1280
      %25 = vsyncadd [#allocation6], %s24
      %s26 = sshll.u32 [#allocation5], 4
      %s27 = int_to_ptr.vmem [resolvable:$true] %s26
      %32 = dma.hbm_to_vmem [thread:$0]  %s1, 1280, %s27, [#allocation6], 256, 256, 16
    $region9: #{tpu_custom_call.1} parent=1 // pred_fallthru
      _
    // Predicated region
    $region10: #{tpu_custom_call.1} parent=1 // pred_check
      _
    $region11: #{tpu_custom_call.1} parent=1 // pred_check_branch
      %34 = sbr.rel (0) target = $region13
    $region12: #{tpu_custom_call.1} parent=1 // pred_region
      %s36 = ssub.s32 2176, 2176
      %37 = vsyncadd [#allocation6], %s36
      %s38 = sshll.u32 [#allocation7], 4
      %s39 = int_to_ptr.vmem [resolvable:$true] %s38
      %44 = dma.hbm_to_vmem [thread:$0]  %s2, 2176, %s39, [#allocation6], 128, 128, 8
    $region13: #{tpu_custom_call.1} parent=1 // pred_fallthru
      _
    // Predicated region
    $region14: #{tpu_custom_call.1} parent=1 // pred_check
      _
    $region15: #{tpu_custom_call.1} parent=1 // pred_check_branch
      %46 = sbr.rel (0) target = $region17
    $region16: #{tpu_custom_call.1} parent=1 // pred_region
      %47 = dma.done [#allocation3], 128
    $region17: #{tpu_custom_call.1} parent=1 // pred_fallthru
      _
    // Predicated region
    $region18: #{tpu_custom_call.1} parent=1 // pred_check
      _
    $region19: #{tpu_custom_call.1} parent=1 // pred_check_branch
      %49 = sbr.rel (0) target = $region21
    $region20: #{tpu_custom_call.1} parent=1 // pred_region
      %50 = dma.done [#allocation6], 1280
    $region21: #{tpu_custom_call.1} parent=1 // pred_fallthru
      _
    // Predicated region
    $region22: #{tpu_custom_call.1} parent=1 // pred_check
      _
    $region23: #{tpu_custom_call.1} parent=1 // pred_check_branch
      %52 = sbr.rel (0) target = $region25
    $region24: #{tpu_custom_call.1} parent=1 // pred_region
      %53 = dma.done [#allocation6], 2176
    $region25: #{tpu_custom_call.1} parent=1 // pred_fallthru
      _
    %v54 = vld [vmem:[#allocation2] sm:$0xff]
    %v55 = vld [vmem:[#allocation5] sm:$0xff]
    %v56 = vld [vmem:[#allocation5 + $0x8] sm:$0xff]
    %v57 = vld [vmem:[#allocation5 + $0x10] sm:$0xff]
    %v58 = vld [vmem:[#allocation5 + $0x18] sm:$0xff]
    %v59 = vld [vmem:[#allocation5 + $0x20] sm:$0xff]
    %v60 = vld [vmem:[#allocation5 + $0x28] sm:$0xff]
    %v61 = vld [vmem:[#allocation5 + $0x30] sm:$0xff]
    %v62 = vld [vmem:[#allocation5 + $0x38] sm:$0xff]
    %v63 = vld [vmem:[#allocation5 + $0x40] sm:$0xff]
    %v64 = vld [vmem:[#allocation5 + $0x48] sm:$0xff]
    %vm65 = vcmask 326656
    %v67 = vsel %vm65, %v54, 0
    %69 = vmatprep.subr.mxu0 0.0
    %70 = vmatpush1.msra.mxu0 0.0
    %71 = vmatprep.subr.mxu0 0.0
    %72 = vmatpush1.msra.mxu0 0.0
    %73 = vmatprep.subr.mxu0 0.0
    %74 = vmatpush1.msra.mxu0 0.0
    %75 = vmatprep.subr.mxu0 0.0
    %76 = vmatpush1.msra.mxu0 0.0
    %77 = vmatprep.subr.mxu0 0.0
    %78 = vmatpush1.msra.mxu0 0.0
    %79 = vmatprep.subr.mxu0 0.0
    %80 = vmatpush1.msra.mxu0 0.0
    %81 = vmatprep.subr.mxu0 0.0
    %82 = vmatpush1.msra.mxu0 0.0
    %83 = vmatprep.subr.mxu0 0.0
    %84 = vmatpush1.msra.mxu0 0.0
    %85 = vmatprep.subr.mxu0 0.0
    %86 = vmatpush1.msra.mxu0 0.0
    %87 = vmatprep.subr.mxu0 0.0
    %88 = vmatpush1.msra.mxu0 0.0
    %89 = vmatprep.subr.mxu0 0.0
    %90 = vmatpush1.msra.mxu0 0.0
    %91 = vmatprep.subr.mxu0 %v64
    %92 = vmatpush1.msra.mxu0 %v63
    %93 = vmatprep.subr.mxu0 %v62
    %94 = vmatpush1.msra.mxu0 %v61
    %95 = vmatprep.subr.mxu0 %v60
    %96 = vmatpush1.msra.mxu0 %v59
    %97 = vmatprep.subr.mxu0 %v58
    %98 = vmatpush1.msra.mxu0 %v57
    %99 = vmatprep.subr.mxu0 %v56
    %100 = vmatpush1.msra.mxu0 %v55
    %101 = vmatprep.subr.mxu0 0.0
    %102 = vmatpush2.msra.mxu0 0.0
    %103 = vmatprep.subr.mxu0 0.0
    %104 = vmatpush2.msra.mxu0 0.0
    %105 = vmatprep.subr.mxu0 0.0
    %106 = vmatpush2.msra.mxu0 0.0
    %107 = vmatprep.subr.mxu0 0.0
    %108 = vmatpush2.msra.mxu0 0.0
    %109 = vmatprep.subr.mxu0 0.0
    %110 = vmatpush2.msra.mxu0 0.0
    %111 = vmatprep.subr.mxu0 0.0
    %112 = vmatpush2.msra.mxu0 0.0
    %113 = vmatprep.subr.mxu0 0.0
    %114 = vmatpush2.msra.mxu0 0.0
    %115 = vmatprep.subr.mxu0 0.0
    %116 = vmatpush2.msra.mxu0 0.0
    %117 = vmatprep.subr.mxu0 0.0
    %118 = vmatpush2.msra.mxu0 0.0
    %119 = vmatprep.subr.mxu0 0.0
    %120 = vmatpush2.msra.mxu0 0.0
    %121 = vmatprep.subr.mxu0 0.0
    %122 = vmatpush2.msra.mxu0 0.0
    %123 = vmatprep.subr.mxu0 0.0
    %124 = vmatpush2.msra.mxu0 0.0
    %125 = vmatprep.subr.mxu0 0.0
    %126 = vmatpush2.msra.mxu0 0.0
    %127 = vmatprep.subr.mxu0 0.0
    %128 = vmatpush2.msra.mxu0 0.0
    %129 = vmatprep.subr.mxu0 0.0
    %130 = vmatpush2.msra.mxu0 0.0
    %131 = vmatprep.subr.mxu0 0.0
    %132 = vmatpush2.msra.mxu0 0.0
    %133 = vmatprep.mubr.f32.mxu0 0.0
    %134 = vmatmul.mubr.f32.gmra.mxu0 %v67
    %v135 = vpop.f32.mrf.mxu0
    %v136 = vadd.f32 0.0, %v135
    %v137 = vpop.f32.mrf.mxu0
    %v138 = vadd.f32 0.0, %v137
    %139 = vdwg.mxu0
    %v140 = vmax.f32 %v136, 0.0
    %141 = vmax.xlane.f32.xlu0 %v138
    %v142 = vpop.xlane.xlu0 %141
    %v143 = vsub.f32 %v138, %v142
    %v144 = vmul.f32 %v143, 1.442695
    %v145 = vpow.pop %v144
    %v146 = vld [vmem:[#allocation7] sm:$0xff]
    %v147 = vld [vmem:[#allocation7 + $0x8] sm:$0xff]
    %v148 = vld [vmem:[#allocation7 + $0x10] sm:$0xff]
    %v149 = vld [vmem:[#allocation7 + $0x18] sm:$0xff]
    %v150 = vld [vmem:[#allocation7 + $0x20] sm:$0xff]
    %v151 = vld [vmem:[#allocation7 + $0x28] sm:$0xff]
    %v152 = vld [vmem:[#allocation7 + $0x30] sm:$0xff]
    %v153 = vld [vmem:[#allocation7 + $0x38] sm:$0xff]
    %v154 = vld [vmem:[#allocation7 + $0x40] sm:$0xff]
    %v155 = vld [vmem:[#allocation7 + $0x48] sm:$0xff]
    %v156 = vld [vmem:[#allocation7 + $0x50] sm:$0xff]
    %v157 = vld [vmem:[#allocation7 + $0x58] sm:$0xff]
    %v158 = vld [vmem:[#allocation7 + $0x60] sm:$0xff]
    %v159 = vld [vmem:[#allocation7 + $0x68] sm:$0xff]
    %v160 = vld [vmem:[#allocation7 + $0x70] sm:$0xff]
    %v161 = vld [vmem:[#allocation7 + $0x78] sm:$0xff]
    %162 = vmatprep.subr.mxu0 0.0
    %163 = vmatpush1.msra.mxu0 %v161
    %164 = vmatprep.subr.mxu0 0.0
    %165 = vmatpush1.msra.mxu0 %v160
    %166 = vmatprep.subr.mxu0 0.0
    %167 = vmatpush1.msra.mxu0 %v159
    %168 = vmatprep.subr.mxu0 0.0
    %169 = vmatpush1.msra.mxu0 %v158
    %170 = vmatprep.subr.mxu0 0.0
    %171 = vmatpush1.msra.mxu0 %v157
    %172 = vmatprep.subr.mxu0 0.0
    %173 = vmatpush1.msra.mxu0 %v156
    %174 = vmatprep.subr.mxu0 0.0
    %175 = vmatpush1.msra.mxu0 %v155
    %176 = vmatprep.subr.mxu0 0.0
    %177 = vmatpush1.msra.mxu0 %v154
    %178 = vmatprep.subr.mxu0 0.0
    %179 = vmatpush1.msra.mxu0 %v153
    %180 = vmatprep.subr.mxu0 0.0
    %181 = vmatpush1.msra.mxu0 %v152
    %182 = vmatprep.subr.mxu0 0.0
    %183 = vmatpush1.msra.mxu0 %v151
    %184 = vmatprep.subr.mxu0 0.0
    %185 = vmatpush1.msra.mxu0 %v150
    %186 = vmatprep.subr.mxu0 0.0
    %187 = vmatpush1.msra.mxu0 %v149
    %188 = vmatprep.subr.mxu0 0.0
    %189 = vmatpush1.msra.mxu0 %v148
    %190 = vmatprep.subr.mxu0 0.0
    %191 = vmatpush1.msra.mxu0 %v147
    %192 = vmatprep.subr.mxu0 0.0
    %193 = vmatpush1.msra.mxu0 %v146
    %194 = vmatprep.subr.mxu0 0.0
    %195 = vmatpush2.msra.mxu0 0.0
    %196 = vmatprep.subr.mxu0 0.0
    %197 = vmatpush2.msra.mxu0 0.0
    %198 = vmatprep.subr.mxu0 0.0
    %199 = vmatpush2.msra.mxu0 0.0
    %200 = vmatprep.subr.mxu0 0.0
    %201 = vmatpush2.msra.mxu0 0.0
    %202 = vmatprep.subr.mxu0 0.0
    %203 = vmatpush2.msra.mxu0 0.0
    %204 = vmatprep.subr.mxu0 0.0
    %205 = vmatpush2.msra.mxu0 0.0
    %206 = vmatprep.subr.mxu0 0.0
    %207 = vmatpush2.msra.mxu0 0.0
    %208 = vmatprep.subr.mxu0 0.0
    %209 = vmatpush2.msra.mxu0 0.0
    %210 = vmatprep.subr.mxu0 0.0
    %211 = vmatpush2.msra.mxu0 0.0
    %212 = vmatprep.subr.mxu0 0.0
    %213 = vmatpush2.msra.mxu0 0.0
    %214 = vmatprep.subr.mxu0 0.0
    %215 = vmatpush2.msra.mxu0 0.0
    %216 = vmatprep.subr.mxu0 0.0
    %217 = vmatpush2.msra.mxu0 0.0
    %218 = vmatprep.subr.mxu0 0.0
    %219 = vmatpush2.msra.mxu0 0.0
    %220 = vmatprep.subr.mxu0 0.0
    %221 = vmatpush2.msra.mxu0 0.0
    %222 = vmatprep.subr.mxu0 0.0
    %223 = vmatpush2.msra.mxu0 0.0
    %224 = vmatprep.subr.mxu0 0.0
    %225 = vmatpush2.msra.mxu0 0.0
    %226 = vmatprep.mubr.f32.mxu0 0.0
    %227 = vmatmul.mubr.f32.gmra.mxu0 %v145
    %v228 = vpop.f32.mrf.mxu0
    %v229 = vadd.f32 0.0, %v228
    %v230 = vpop.f32.mrf.mxu0
    %231 = vdwg.mxu0
    %v232 = vrcp.pop %v229
    %v233 = vmul.f32 %v145, %v232
    %v234 = vld [vmem:[#allocation7 + $0x80] sm:$0x1]
    %v235 = vmul.f32 %v233, %v140
    %v236 = vlaneseq
    %v237 = vshrl.u32 %v236, 7
    %v238 = vsub.s32 0, %v237
    %v239 = vrot.slane %v234, %v238
    %v240 = vadd.f32 %v235, %v239
    %241 = vst [vmem:[#allocation8] sm:$0xff] %v240
    // Predicated region
    $region26: #{tpu_custom_call.1} parent=1 // pred_check
      _
    $region27: #{tpu_custom_call.1} parent=1 // pred_check_branch
      %243 = sbr.rel (0) target = $region29
    $region28: #{tpu_custom_call.1} parent=1 // pred_region
      %s245 = ssub.s32 128, 128
      %246 = vsyncadd [#allocation4], %s245
      %s248 = sshll.u32 [#allocation8], 4
      %s249 = int_to_ptr.vmem [resolvable:$true] %s248
      %251 = dma.vmem_to_hbm [thread:$0]  %s249, 128, %s3, [#allocation4]
    $region29: #{tpu_custom_call.1} parent=1 // pred_fallthru
      _
    // Predicated region
    $region30: #{tpu_custom_call.1} parent=1 // pred_check
      _
    $region31: #{tpu_custom_call.1} parent=1 // pred_check_branch
      %253 = sbr.rel (0) target = $region33
    $region32: #{tpu_custom_call.1} parent=1 // pred_region
      %254 = dma.done [#allocation4], 128
    $region33: #{tpu_custom_call.1} parent=1 // pred_fallthru
      _
    %255 = vsyncpa [#allocation3], 1
    %256 = vsyncpa [#allocation6], 1
    %257 = vsyncpa [#allocation4], 1

</llo_original>
